<compile_context>
chip_gen: v6e
topology: v6e:2x2x1
jax: 0.10.0
libtpu: 0.0.40
codegen_flags: <defaults>
</compile_context>

<pallas_src>
import functools

import jax
import jax.numpy as jnp
from jax.experimental import pallas as pl
from jax.experimental.pallas import tpu as pltpu

LATENT_SIZE = 8
HIDDEN_DIM = 64
NUM_LAYERS = 4          # (Linear + LeakyReLU) blocks before the final Linear
NEG_SLOPE = 0.2


def _leaky_relu(x, slope=NEG_SLOPE):
    # max-form: 2 VPU ops (mul+max) instead of 3 (mul+cmp+select); valid for 0<slope<1.
    return jnp.maximum(x, slope * x)


def _round_up(x, m):
    return ((x + m - 1) // m) * m


def _cdiv(a, b):
    return -(-a // b)


def mlp_decoder_kernel(xt_ref, w0_ref, b0_ref, wh_ref, bh_ref, w4_ref, b4_ref,
                       o_ref, *, acc_dtype):
    """Fused 5-layer MLP in transposed ([features, rows]) layout.

    Rows sit on the lane axis (tile width = multiple of 128), so every
    intermediate vreg and every store is lane-dense.  Weights are in torch
    layout [out, in], so each layer is  h <- W @ h  on the MXU.  On the fast
    path all operands (input, weights, biases, activations) are bf16 with no
    per-layer casts; the MXU accumulates in f32 internally, and only the final
    layer materializes an f32 result for the f32 bias add + store.
    """
    # layer 0: [hidden, latent] @ [latent, tm]
    h = jnp.dot(w0_ref[...], xt_ref[...], preferred_element_type=acc_dtype)
    h = _leaky_relu(h + b0_ref[...])

    # layers 1..3: [hidden, hidden] @ [hidden, tm], statically unrolled
    for k in range(wh_ref.shape[0]):
        h = jnp.dot(wh_ref[k], h, preferred_element_type=acc_dtype)
        h = _leaky_relu(h + bh_ref[k])

    # final layer: [latent, hidden] @ [hidden, tm], f32 result + f32 bias
    out = jnp.dot(w4_ref[...], h, preferred_element_type=jnp.float32)
    o_ref[...] = (out + b4_ref[...]).astype(o_ref.dtype)


def _choose_tiling(M, tm):
    """128-aligned row tile; >=2 (even) grid steps when M allows (v7x 2 TCs)."""
    tm_req = max(128, _round_up(min(int(tm), max(M, 1)), 128))
    g = _cdiv(max(M, 1), tm_req)
    if g == 1 and M > 128:
        g = 2                      # give v7x's second TensorCore work
    if g > 1 and g % 2:
        g += 1                     # even step count splits cleanly across 2 TCs
    tm_eff = _round_up(_cdiv(max(M, 1), g), 128)
    return tm_eff, g


@functools.partial(jax.jit,
                   static_argnames=("tm", "compute_dtype", "return_transposed"))
def mlp_decoder_forward(z, params, *, tm=8192, compute_dtype=jnp.bfloat16,
                        return_transposed=False):
    """z: [..., latent]. Matches PyTorch MLPDecoder.forward (f32 params).

    compute_dtype=jnp.bfloat16 is the fast path (v6e/v7x); pass jnp.float32 for
    bit-accurate results or on v5e (no bf16 VPU).  return_transposed=True
    returns the kernel's native lane-dense [latent, M] layout so a downstream
    consumer can skip the final transpose pass entirely.
    """
    orig_shape = z.shape
    latent = orig_shape[-1]
    hidden = params["w0"].shape[0]
    nh = params["wh"].shape[0]

    x = z.reshape(-1, latent)
    M = x.shape[0]

    tm_eff, g = _choose_tiling(M, tm)
    M_pad = g * tm_eff

    # Transposed lane-dense layout (rows on lanes). The f32->compute_dtype cast
    # is fused by XLA into this single transpose+pad pass (halves input DMA bytes).
    xt = jnp.pad(x.T.astype(compute_dtype), ((0, 0), (0, M_pad - M)))

    # Cast weights / biases once in the wrapper (not per grid step). The final
    # bias stays f32 so the last layer's output is produced at full precision.
    w0 = params["w0"].astype(compute_dtype)
    b0 = params["b0"].astype(compute_dtype)
    wh = params["wh"].astype(compute_dtype)
    bh = params["bh"].astype(compute_dtype)
    w4 = params["w4"].astype(compute_dtype)
    b4 = params["b4"].astype(jnp.float32)

    flops = 2 * M_pad * (latent * hidden + nh * hidden * hidden + hidden * latent)
    bytes_accessed = int(
        xt.size * xt.dtype.itemsize
        + latent * M_pad * jnp.dtype(z.dtype).itemsize
        + sum(a.size * a.dtype.itemsize for a in (w0, b0, wh, bh, w4, b4)))

    tile_spec = pl.BlockSpec((latent, tm_eff), lambda i: (0, i))
    full2 = lambda a, b: pl.BlockSpec((a, b), lambda i: (0, 0))
    full3 = lambda a, b, c: pl.BlockSpec((a, b, c), lambda i: (0, 0, 0))

    kernel = functools.partial(mlp_decoder_kernel, acc_dtype=compute_dtype)

    out_t = pl.pallas_call(
        kernel,
        out_shape=jax.ShapeDtypeStruct((latent, M_pad), z.dtype),
        grid_spec=pl.GridSpec(
            grid=(g,),
            in_specs=[
                tile_spec,                                   # x^T tile [latent, tm]
                full2(hidden, latent), full2(hidden, 1),     # layer 0
                full3(nh, hidden, hidden),                   # stacked hidden W
                full3(nh, hidden, 1),                        # stacked hidden b
                full2(latent, hidden), full2(latent, 1),     # final layer
            ],
            out_specs=tile_spec,
        ),
        compiler_params=pltpu.CompilerParams(
            dimension_semantics=("parallel",),
            vmem_limit_bytes=32 * 1024 * 1024,
        ),
        cost_estimate=pl.CostEstimate(flops=flops, transcendentals=0,
                                      bytes_accessed=bytes_accessed),
    )(xt, w0, b0, wh, bh, w4, b4)

    if return_transposed:
        return out_t[:, :M]                      # lane-dense [latent, M]
    # Layout plumbing back to [..., latent]; consumers that can accept the
    # transposed layout should use return_transposed=True and skip this pass.
    return out_t[:, :M].T.reshape(orig_shape)


def init_params(key, latent_size=LATENT_SIZE, hidden_dim=HIDDEN_DIM,
                num_layers=NUM_LAYERS):
    """Deterministic PyTorch-style init: U(-1/sqrt(fan_in), 1/sqrt(fan_in)).

    Weights are stored in torch layout [out_features, in_features]; biases as
    [out_features, 1] (column vectors for the transposed kernel layout). The
    three hidden layers are stacked as wh: [3, hidden, hidden], bh: [3, hidden, 1].
    """
    keys = jax.random.split(key, 2 * (num_layers + 1))

    def linear(kw, kb, fan_in, fan_out):
        bound = 1.0 / (fan_in ** 0.5)
        w = jax.random.uniform(kw, (fan_out, fan_in), minval=-bound,
                               maxval=bound, dtype=jnp.float32)
        b = jax.random.uniform(kb, (fan_out, 1), minval=-bound,
                               maxval=bound, dtype=jnp.float32)
        return w, b

    w0, b0 = linear(keys[0], keys[1], latent_size, hidden_dim)
    whs, bhs = [], []
    for l in range(1, num_layers):
        w, b = linear(keys[2 * l], keys[2 * l + 1], hidden_dim, hidden_dim)
        whs.append(w)
        bhs.append(b)
    w4, b4 = linear(keys[2 * num_layers], keys[2 * num_layers + 1],
                    hidden_dim, latent_size)
    return {
        "w0": w0, "b0": b0,
        "wh": jnp.stack(whs), "bh": jnp.stack(bhs),
        "w4": w4, "b4": b4,
    }


def reference_forward(z, params):
    """Pure-JAX reference matching the PyTorch module semantics (f32)."""
    h = z @ params["w0"].T + params["b0"][:, 0]
    h = jnp.where(h > 0, h, NEG_SLOPE * h)
    for k in range(params["wh"].shape[0]):
        h = h @ params["wh"][k].T + params["bh"][k, :, 0]
        h = jnp.where(h > 0, h, NEG_SLOPE * h)
    return h @ params["w4"].T + params["b4"][:, 0]


if __name__ == "__main__":
    key = jax.random.PRNGKey(0)
    pkey, zkey = jax.random.split(key)

    params = init_params(pkey)

    # Small input consistent with the module: batch=2, seq=8, latent=8.
    z = jax.random.normal(zkey, (2, 8, LATENT_SIZE), dtype=jnp.float32)
    ref = reference_forward(z, params)

    # f32 matmul/elementwise path — bit-accurate against the reference.
    out_f32 = jax.block_until_ready(
        mlp_decoder_forward(z, params, compute_dtype=jnp.float32))
    assert out_f32.shape == z.shape
    assert jnp.allclose(out_f32, ref, atol=1e-5, rtol=1e-5), (
        f"f32 max err {jnp.max(jnp.abs(out_f32 - ref))}")

    # Default fast path: bf16 end-to-end in the kernel (f32 MXU accumulation);
    # tolerance reflects the expected bf16 error across 5 chained layers.
    out_bf16 = jax.block_until_ready(mlp_decoder_forward(z, params))
    assert out_bf16.shape == z.shape
    assert jnp.allclose(out_bf16, ref, atol=1e-1, rtol=1e-1), (
        f"bf16 max err {jnp.max(jnp.abs(out_bf16 - ref))}")

    print("KERNEL_OK")
</pallas_src>

<mosaic_0001>
module attributes {stable_mosaic.version = 11 : i64} {
  func.func @mlp_decoder_kernel(%arg0: i32, %arg1: memref<8x128xf32, #tpu.memory_space<vmem>>, %arg2: memref<64x8xf32, #tpu.memory_space<vmem>>, %arg3: memref<64x1xf32, #tpu.memory_space<vmem>>, %arg4: memref<3x64x64xf32, #tpu.memory_space<vmem>>, %arg5: memref<3x64x1xf32, #tpu.memory_space<vmem>>, %arg6: memref<8x64xf32, #tpu.memory_space<vmem>>, %arg7: memref<8x1xf32, #tpu.memory_space<vmem>>, %arg8: memref<8x128xf32, #tpu.memory_space<vmem>>) attributes {dimension_semantics = [#tpu.dimension_semantics<parallel>], iteration_bounds = array<i64: 1>, scalar_prefetch = 0 : i64, scratch_operands = 0 : i64, tpu.core_type = #tpu.core_type<tc>, window_params = [{transform_indices = @transform_0, window_bounds = array<i64: 8, 128>}, {pipeline_mode = #tpu.pipeline_mode<synchronous>, transform_indices = @transform_1, window_bounds = array<i64: 64, 8>}, {pipeline_mode = #tpu.pipeline_mode<synchronous>, transform_indices = @transform_2, window_bounds = array<i64: 64, 1>}, {pipeline_mode = #tpu.pipeline_mode<synchronous>, transform_indices = @transform_3, window_bounds = array<i64: 3, 64, 64>}, {pipeline_mode = #tpu.pipeline_mode<synchronous>, transform_indices = @transform_4, window_bounds = array<i64: 3, 64, 1>}, {pipeline_mode = #tpu.pipeline_mode<synchronous>, transform_indices = @transform_5, window_bounds = array<i64: 8, 64>}, {pipeline_mode = #tpu.pipeline_mode<synchronous>, transform_indices = @transform_6, window_bounds = array<i64: 8, 1>}, {transform_indices = @transform_7, window_bounds = array<i64: 8, 128>}]} {
    %c0 = arith.constant 0 : index
    %c0_0 = arith.constant 0 : index
    %0 = vector.load %arg2[%c0, %c0_0] : memref<64x8xf32, #tpu.memory_space<vmem>>, vector<64x8xf32>
    %c0_1 = arith.constant 0 : index
    %c0_2 = arith.constant 0 : index
    %1 = vector.load %arg1[%c0_1, %c0_2] : memref<8x128xf32, #tpu.memory_space<vmem>>, vector<8x128xf32>
    %cst = arith.constant dense<0.000000e+00> : vector<64x128xf32>
    %2 = tpu.matmul %0, %1, %cst {dimension_numbers = #tpu.dot_dimension_numbers<[1], [0], [0], [1], [0, 0, 1, 1], [], []>} : vector<64x8xf32>, vector<8x128xf32>, vector<64x128xf32> -> vector<64x128xf32>
    %c0_3 = arith.constant 0 : index
    %c0_4 = arith.constant 0 : index
    %3 = vector.load %arg3[%c0_3, %c0_4] : memref<64x1xf32, #tpu.memory_space<vmem>>, vector<64x1xf32>
    %4 = vector.broadcast %3 : vector<64x1xf32> to vector<64x128xf32>
    %5 = arith.addf %2, %4 : vector<64x128xf32>
    %cst_5 = arith.constant 2.000000e-01 : f32
    %6 = vector.broadcast %cst_5 : f32 to vector<64x128xf32>
    %7 = arith.mulf %6, %5 : vector<64x128xf32>
    %8 = arith.maximumf %5, %7 : vector<64x128xf32>
    %c0_6 = arith.constant 0 : index
    %c0_7 = arith.constant 0 : index
    %c0_8 = arith.constant 0 : index
    %9 = vector.load %arg4[%c0_6, %c0_7, %c0_8] : memref<3x64x64xf32, #tpu.memory_space<vmem>>, vector<1x64x64xf32>
    %10 = vector.shape_cast %9 : vector<1x64x64xf32> to vector<64x64xf32>
    %cst_9 = arith.constant dense<0.000000e+00> : vector<64x128xf32>
    %11 = tpu.matmul %10, %8, %cst_9 {dimension_numbers = #tpu.dot_dimension_numbers<[1], [0], [0], [1], [0, 0, 1, 1], [], []>} : vector<64x64xf32>, vector<64x128xf32>, vector<64x128xf32> -> vector<64x128xf32>
    %c0_10 = arith.constant 0 : index
    %c0_11 = arith.constant 0 : index
    %c0_12 = arith.constant 0 : index
    %12 = vector.load %arg5[%c0_10, %c0_11, %c0_12] : memref<3x64x1xf32, #tpu.memory_space<vmem>>, vector<1x64x1xf32>
    %13 = vector.shape_cast %12 : vector<1x64x1xf32> to vector<64x1xf32>
    %14 = vector.broadcast %13 : vector<64x1xf32> to vector<64x128xf32>
    %15 = arith.addf %11, %14 : vector<64x128xf32>
    %cst_13 = arith.constant 2.000000e-01 : f32
    %16 = vector.broadcast %cst_13 : f32 to vector<64x128xf32>
    %17 = arith.mulf %16, %15 : vector<64x128xf32>
    %18 = arith.maximumf %15, %17 : vector<64x128xf32>
    %c1 = arith.constant 1 : index
    %c0_14 = arith.constant 0 : index
    %c0_15 = arith.constant 0 : index
    %19 = vector.load %arg4[%c1, %c0_14, %c0_15] : memref<3x64x64xf32, #tpu.memory_space<vmem>>, vector<1x64x64xf32>
    %20 = vector.shape_cast %19 : vector<1x64x64xf32> to vector<64x64xf32>
    %cst_16 = arith.constant dense<0.000000e+00> : vector<64x128xf32>
    %21 = tpu.matmul %20, %18, %cst_16 {dimension_numbers = #tpu.dot_dimension_numbers<[1], [0], [0], [1], [0, 0, 1, 1], [], []>} : vector<64x64xf32>, vector<64x128xf32>, vector<64x128xf32> -> vector<64x128xf32>
    %c1_17 = arith.constant 1 : index
    %c0_18 = arith.constant 0 : index
    %c0_19 = arith.constant 0 : index
    %22 = vector.load %arg5[%c1_17, %c0_18, %c0_19] : memref<3x64x1xf32, #tpu.memory_space<vmem>>, vector<1x64x1xf32>
    %23 = vector.shape_cast %22 : vector<1x64x1xf32> to vector<64x1xf32>
    %24 = vector.broadcast %23 : vector<64x1xf32> to vector<64x128xf32>
    %25 = arith.addf %21, %24 : vector<64x128xf32>
    %cst_20 = arith.constant 2.000000e-01 : f32
    %26 = vector.broadcast %cst_20 : f32 to vector<64x128xf32>
    %27 = arith.mulf %26, %25 : vector<64x128xf32>
    %28 = arith.maximumf %25, %27 : vector<64x128xf32>
    %c2 = arith.constant 2 : index
    %c0_21 = arith.constant 0 : index
    %c0_22 = arith.constant 0 : index
    %29 = vector.load %arg4[%c2, %c0_21, %c0_22] : memref<3x64x64xf32, #tpu.memory_space<vmem>>, vector<1x64x64xf32>
    %30 = vector.shape_cast %29 : vector<1x64x64xf32> to vector<64x64xf32>
    %cst_23 = arith.constant dense<0.000000e+00> : vector<64x128xf32>
    %31 = tpu.matmul %30, %28, %cst_23 {dimension_numbers = #tpu.dot_dimension_numbers<[1], [0], [0], [1], [0, 0, 1, 1], [], []>} : vector<64x64xf32>, vector<64x128xf32>, vector<64x128xf32> -> vector<64x128xf32>
    %c2_24 = arith.constant 2 : index
    %c0_25 = arith.constant 0 : index
    %c0_26 = arith.constant 0 : index
    %32 = vector.load %arg5[%c2_24, %c0_25, %c0_26] : memref<3x64x1xf32, #tpu.memory_space<vmem>>, vector<1x64x1xf32>
    %33 = vector.shape_cast %32 : vector<1x64x1xf32> to vector<64x1xf32>
    %34 = vector.broadcast %33 : vector<64x1xf32> to vector<64x128xf32>
    %35 = arith.addf %31, %34 : vector<64x128xf32>
    %cst_27 = arith.constant 2.000000e-01 : f32
    %36 = vector.broadcast %cst_27 : f32 to vector<64x128xf32>
    %37 = arith.mulf %36, %35 : vector<64x128xf32>
    %38 = arith.maximumf %35, %37 : vector<64x128xf32>
    %c0_28 = arith.constant 0 : index
    %c0_29 = arith.constant 0 : index
    %39 = vector.load %arg6[%c0_28, %c0_29] : memref<8x64xf32, #tpu.memory_space<vmem>>, vector<8x64xf32>
    %cst_30 = arith.constant dense<0.000000e+00> : vector<8x128xf32>
    %40 = tpu.matmul %39, %38, %cst_30 {dimension_numbers = #tpu.dot_dimension_numbers<[1], [0], [0], [1], [0, 0, 1, 1], [], []>} : vector<8x64xf32>, vector<64x128xf32>, vector<8x128xf32> -> vector<8x128xf32>
    %c0_31 = arith.constant 0 : index
    %c0_32 = arith.constant 0 : index
    %41 = vector.load %arg7[%c0_31, %c0_32] : memref<8x1xf32, #tpu.memory_space<vmem>>, vector<8x1xf32>
    %42 = vector.broadcast %41 : vector<8x1xf32> to vector<8x128xf32>
    %43 = arith.addf %40, %42 : vector<8x128xf32>
    %c0_33 = arith.constant 0 : index
    %c0_34 = arith.constant 0 : index
    %44 = vector.load %arg8[%c0_33, %c0_34] : memref<8x128xf32, #tpu.memory_space<vmem>>, vector<8x128xf32>
    tpu.vector_store %arg8[%c0_33, %c0_34], %43 {strides = array<i32>} : memref<8x128xf32, #tpu.memory_space<vmem>>, vector<8x128xf32>,
    return
  }
  func.func @transform_0(%arg0: i32) -> (i32, i32) {
    %c0_i32 = arith.constant 0 : i32
    %c0_i32_0 = arith.constant 0 : i32
    return %c0_i32, %arg0 : i32, i32
  }
  func.func @transform_1(%arg0: i32) -> (i32, i32) {
    %c0_i32 = arith.constant 0 : i32
    %c0_i32_0 = arith.constant 0 : i32
    %c0_i32_1 = arith.constant 0 : i32
    return %c0_i32, %c0_i32_0 : i32, i32
  }
  func.func @transform_2(%arg0: i32) -> (i32, i32) {
    %c0_i32 = arith.constant 0 : i32
    %c0_i32_0 = arith.constant 0 : i32
    %c0_i32_1 = arith.constant 0 : i32
    return %c0_i32, %c0_i32_0 : i32, i32
  }
  func.func @transform_3(%arg0: i32) -> (i32, i32, i32) {
    %c0_i32 = arith.constant 0 : i32
    %c0_i32_0 = arith.constant 0 : i32
    %c0_i32_1 = arith.constant 0 : i32
    %c0_i32_2 = arith.constant 0 : i32
    return %c0_i32, %c0_i32_0, %c0_i32_1 : i32, i32, i32
  }
  func.func @transform_4(%arg0: i32) -> (i32, i32, i32) {
    %c0_i32 = arith.constant 0 : i32
    %c0_i32_0 = arith.constant 0 : i32
    %c0_i32_1 = arith.constant 0 : i32
    %c0_i32_2 = arith.constant 0 : i32
    return %c0_i32, %c0_i32_0, %c0_i32_1 : i32, i32, i32
  }
  func.func @transform_5(%arg0: i32) -> (i32, i32) {
    %c0_i32 = arith.constant 0 : i32
    %c0_i32_0 = arith.constant 0 : i32
    %c0_i32_1 = arith.constant 0 : i32
    return %c0_i32, %c0_i32_0 : i32, i32
  }
  func.func @transform_6(%arg0: i32) -> (i32, i32) {
    %c0_i32 = arith.constant 0 : i32
    %c0_i32_0 = arith.constant 0 : i32
    %c0_i32_1 = arith.constant 0 : i32
    return %c0_i32, %c0_i32_0 : i32, i32
  }
  func.func @transform_7(%arg0: i32) -> (i32, i32) {
    %c0_i32 = arith.constant 0 : i32
    %c0_i32_0 = arith.constant 0 : i32
    return %c0_i32, %arg0 : i32, i32
  }
}

</mosaic_0001>

<llo_original>
// kernel: mlp_decoder_forward.1
$region0: #{mlp_decoder_forward.1}
  #allocation0 [shape = 'u32[]', space=smem, size = 0x4, offset = 0x4, fixed_abs, tag = 'smem constant byte address 0x4 - core index']
  #allocation1 [shape = 'u32[144,128]{1,0:T(1,128)}', space=vmem, size = 0x12000, scoped, tag = 'internal scratch']
  %s0 = inlined_call_operand.vmem [shape: f32[8,128], index: 0, kind: input, shape index: {}]
  %s1 = inlined_call_operand.vmem [shape: f32[64,8], index: 1, kind: input, shape index: {}]
  %s2 = inlined_call_operand.vmem [shape: f32[64,1], index: 2, kind: input, shape index: {}]
  %s3 = inlined_call_operand.vmem [shape: f32[3,64,64], index: 3, kind: input, shape index: {}]
  %s4 = inlined_call_operand.vmem [shape: f32[3,64,1], index: 4, kind: input, shape index: {}]
  %s5 = inlined_call_operand.vmem [shape: f32[8,64], index: 5, kind: input, shape index: {}]
  %s6 = inlined_call_operand.vmem [shape: f32[8,1], index: 6, kind: input, shape index: {}]
  %s7 = inlined_call_operand.vmem [shape: f32[8,128], index: 7, kind: output, shape index: {}]
  %s8 = sld [smem:[#allocation0]]
  $region38: #{mlp_decoder_forward.1} parent=0
    _
  %s10 = ssub.s32 1, %s8
  %s11 = scalar_select 0, %s10, %s8
  // Predicated region
  $region2: #{mlp_decoder_forward.1} parent=0 // pred_check
    _
  $region3: #{mlp_decoder_forward.1} parent=0 // pred_check_branch
    %13 = sbr.rel (0) target = $region5
  $region4: #{mlp_decoder_forward.1} parent=0 // pred_region
    _
  $region5: #{mlp_decoder_forward.1} parent=0 // pred_fallthru
    _
  // Predicated region
  $region6: #{mlp_decoder_forward.1} parent=0 // pred_check
    _
  $region7: #{mlp_decoder_forward.1} parent=0 // pred_check_branch
    %15 = sbr.rel (0) target = $region9
  $region8: #{mlp_decoder_forward.1} parent=0 // pred_region
    _
  $region9: #{mlp_decoder_forward.1} parent=0 // pred_fallthru
    _
  // Predicated region
  $region10: #{mlp_decoder_forward.1} parent=0 // pred_check
    _
  $region11: #{mlp_decoder_forward.1} parent=0 // pred_check_branch
    %17 = sbr.rel (0) target = $region13
  $region12: #{mlp_decoder_forward.1} parent=0 // pred_region
    _
  $region13: #{mlp_decoder_forward.1} parent=0 // pred_fallthru
    _
  // Predicated region
  $region14: #{mlp_decoder_forward.1} parent=0 // pred_check
    _
  $region15: #{mlp_decoder_forward.1} parent=0 // pred_check_branch
    %19 = sbr.rel (0) target = $region17
  $region16: #{mlp_decoder_forward.1} parent=0 // pred_region
    _
  $region17: #{mlp_decoder_forward.1} parent=0 // pred_fallthru
    _
  // Predicated region
  $region18: #{mlp_decoder_forward.1} parent=0 // pred_check
    _
  $region19: #{mlp_decoder_forward.1} parent=0 // pred_check_branch
    %21 = sbr.rel (0) target = $region21
  $region20: #{mlp_decoder_forward.1} parent=0 // pred_region
    _
  $region21: #{mlp_decoder_forward.1} parent=0 // pred_fallthru
    _
  // Predicated region
  $region22: #{mlp_decoder_forward.1} parent=0 // pred_check
    _
  $region23: #{mlp_decoder_forward.1} parent=0 // pred_check_branch
    %23 = sbr.rel (0) target = $region25
  $region24: #{mlp_decoder_forward.1} parent=0 // pred_region
    _
  $region25: #{mlp_decoder_forward.1} parent=0 // pred_fallthru
    _
  // Predicated region
  $region26: #{mlp_decoder_forward.1} parent=0 // pred_check
    _
  $region27: #{mlp_decoder_forward.1} parent=0 // pred_check_branch
    %25 = sbr.rel (0) target = $region29
  $region28: #{mlp_decoder_forward.1} parent=0 // pred_region
    _
  $region29: #{mlp_decoder_forward.1} parent=0 // pred_fallthru
    _
  %v26 = vld [vmem:[%s1] sm:$0xff]
  %v27 = vld [vmem:[%s1 + $0x8] sm:$0xff]
  %v28 = vld [vmem:[%s1 + $0x10] sm:$0xff]
  %v29 = vld [vmem:[%s1 + $0x18] sm:$0xff]
  %v30 = vld [vmem:[%s1 + $0x20] sm:$0xff]
  %v31 = vld [vmem:[%s1 + $0x28] sm:$0xff]
  %v32 = vld [vmem:[%s1 + $0x30] sm:$0xff]
  %v33 = vld [vmem:[%s1 + $0x38] sm:$0xff]
  %v34 = vld [vmem:[%s0] sm:$0xff]
  %v35 = vld [vmem:[%s2] sm:$0xff]
  %v36 = vld [vmem:[%s2 + $0x8] sm:$0xff]
  %v37 = vld [vmem:[%s2 + $0x10] sm:$0xff]
  %v38 = vld [vmem:[%s2 + $0x18] sm:$0xff]
  %v39 = vld [vmem:[%s2 + $0x20] sm:$0xff]
  %v40 = vld [vmem:[%s2 + $0x28] sm:$0xff]
  %v41 = vld [vmem:[%s2 + $0x30] sm:$0xff]
  %v42 = vld [vmem:[%s2 + $0x38] sm:$0xff]
  %44 = vset.pattern.permute.xlu0 0
  %45 = vperm.xlu0 %44, %v35
  %v46 = vpop.permute.xlu0 %45
  %49 = vset.pattern.permute.xlu0 0
  %50 = vperm.xlu0 %49, %v36
  %v51 = vpop.permute.xlu0 %50
  %54 = vset.pattern.permute.xlu0 0
  %55 = vperm.xlu0 %54, %v37
  %v56 = vpop.permute.xlu0 %55
  %59 = vset.pattern.permute.xlu0 0
  %60 = vperm.xlu0 %59, %v38
  %v61 = vpop.permute.xlu0 %60
  %64 = vset.pattern.permute.xlu0 0
  %65 = vperm.xlu0 %64, %v39
  %v66 = vpop.permute.xlu0 %65
  %69 = vset.pattern.permute.xlu0 0
  %70 = vperm.xlu0 %69, %v40
  %v71 = vpop.permute.xlu0 %70
  %74 = vset.pattern.permute.xlu0 0
  %75 = vperm.xlu0 %74, %v41
  %v76 = vpop.permute.xlu0 %75
  %79 = vset.pattern.permute.xlu0 0
  %80 = vperm.xlu0 %79, %v42
  %v81 = vpop.permute.xlu0 %80
  %vm83 = vcmask 64512
  %v85 = vsel %vm83, %v26, 0
  %v88 = vsel %vm83, %v27, 0
  %v91 = vsel %vm83, %v28, 0
  %v94 = vsel %vm83, %v29, 0
  %v97 = vsel %vm83, %v30, 0
  %v100 = vsel %vm83, %v31, 0
  %v103 = vsel %vm83, %v32, 0
  %v106 = vsel %vm83, %v33, 0
  %108 = vmatprep.subr.mxu0 0.0
  %109 = vmatpush1.msra.mxu0 0.0
  %110 = vmatprep.subr.mxu0 0.0
  %111 = vmatpush1.msra.mxu0 0.0
  %112 = vmatprep.subr.mxu0 0.0
  %113 = vmatpush1.msra.mxu0 0.0
  %114 = vmatprep.subr.mxu0 0.0
  %115 = vmatpush1.msra.mxu0 0.0
  %116 = vmatprep.subr.mxu0 0.0
  %117 = vmatpush1.msra.mxu0 0.0
  %118 = vmatprep.subr.mxu0 0.0
  %119 = vmatpush1.msra.mxu0 0.0
  %120 = vmatprep.subr.mxu0 0.0
  %121 = vmatpush1.msra.mxu0 0.0
  %122 = vmatprep.subr.mxu0 0.0
  %123 = vmatpush1.msra.mxu0 0.0
  %124 = vmatprep.subr.mxu0 0.0
  %125 = vmatpush1.msra.mxu0 0.0
  %126 = vmatprep.subr.mxu0 0.0
  %127 = vmatpush1.msra.mxu0 0.0
  %128 = vmatprep.subr.mxu0 0.0
  %129 = vmatpush1.msra.mxu0 0.0
  %130 = vmatprep.subr.mxu0 0.0
  %131 = vmatpush1.msra.mxu0 0.0
  %132 = vmatprep.subr.mxu0 0.0
  %133 = vmatpush1.msra.mxu0 0.0
  %134 = vmatprep.subr.mxu0 0.0
  %135 = vmatpush1.msra.mxu0 0.0
  %136 = vmatprep.subr.mxu0 0.0
  %137 = vmatpush1.msra.mxu0 0.0
  %138 = vmatprep.subr.mxu0 0.0
  %139 = vmatpush1.msra.mxu0 %v34
  %140 = vmatprep.subr.mxu0 0.0
  %141 = vmatpush2.msra.mxu0 0.0
  %142 = vmatprep.subr.mxu0 0.0
  %143 = vmatpush2.msra.mxu0 0.0
  %144 = vmatprep.subr.mxu0 0.0
  %145 = vmatpush2.msra.mxu0 0.0
  %146 = vmatprep.subr.mxu0 0.0
  %147 = vmatpush2.msra.mxu0 0.0
  %148 = vmatprep.subr.mxu0 0.0
  %149 = vmatpush2.msra.mxu0 0.0
  %150 = vmatprep.subr.mxu0 0.0
  %151 = vmatpush2.msra.mxu0 0.0
  %152 = vmatprep.subr.mxu0 0.0
  %153 = vmatpush2.msra.mxu0 0.0
  %154 = vmatprep.subr.mxu0 0.0
  %155 = vmatpush2.msra.mxu0 0.0
  %156 = vmatprep.subr.mxu0 0.0
  %157 = vmatpush2.msra.mxu0 0.0
  %158 = vmatprep.subr.mxu0 0.0
  %159 = vmatpush2.msra.mxu0 0.0
  %160 = vmatprep.subr.mxu0 0.0
  %161 = vmatpush2.msra.mxu0 0.0
  %162 = vmatprep.subr.mxu0 0.0
  %163 = vmatpush2.msra.mxu0 0.0
  %164 = vmatprep.subr.mxu0 0.0
  %165 = vmatpush2.msra.mxu0 0.0
  %166 = vmatprep.subr.mxu0 0.0
  %167 = vmatpush2.msra.mxu0 0.0
  %168 = vmatprep.subr.mxu0 0.0
  %169 = vmatpush2.msra.mxu0 0.0
  %170 = vmatprep.subr.mxu0 0.0
  %171 = vmatpush2.msra.mxu0 0.0
  %172 = vmatprep.mubr.f32.mxu0 0.0
  %173 = vmatmul.mubr.f32.gmra.mxu0 %v85
  %v174 = vpop.f32.mrf.mxu0
  %v175 = vadd.f32 %v46, %v174
  %v176 = vpop.f32.mrf.mxu0
  %177 = vmatprep.mubr.f32.mxu0 0.0
  %178 = vmatmul.mubr.f32.gmra.mxu0 %v88
  %v179 = vpop.f32.mrf.mxu0
  %v180 = vadd.f32 %v51, %v179
  %v181 = vpop.f32.mrf.mxu0
  %182 = vmatprep.mubr.f32.mxu0 0.0
  %183 = vmatmul.mubr.f32.gmra.mxu0 %v91
  %v184 = vpop.f32.mrf.mxu0
  %v185 = vadd.f32 %v56, %v184
  %v186 = vpop.f32.mrf.mxu0
  %187 = vmatprep.mubr.f32.mxu0 0.0
  %188 = vmatmul.mubr.f32.gmra.mxu0 %v94
  %v189 = vpop.f32.mrf.mxu0
  %v190 = vadd.f32 %v61, %v189
  %v191 = vpop.f32.mrf.mxu0
  %192 = vmatprep.mubr.f32.mxu0 0.0
  %193 = vmatmul.mubr.f32.gmra.mxu0 %v97
  %v194 = vpop.f32.mrf.mxu0
  %v195 = vadd.f32 %v66, %v194
  %v196 = vpop.f32.mrf.mxu0
  %197 = vmatprep.mubr.f32.mxu0 0.0
  %198 = vmatmul.mubr.f32.gmra.mxu0 %v100
  %v199 = vpop.f32.mrf.mxu0
  %v200 = vadd.f32 %v71, %v199
  %v201 = vpop.f32.mrf.mxu0
  %202 = vmatprep.mubr.f32.mxu0 0.0
  %203 = vmatmul.mubr.f32.gmra.mxu0 %v103
  %v204 = vpop.f32.mrf.mxu0
  %v205 = vadd.f32 %v76, %v204
  %v206 = vpop.f32.mrf.mxu0
  %207 = vmatprep.mubr.f32.mxu0 0.0
  %208 = vmatmul.mubr.f32.gmra.mxu0 %v106
  %v209 = vpop.f32.mrf.mxu0
  %v210 = vadd.f32 %v81, %v209
  %v211 = vpop.f32.mrf.mxu0
  %212 = vdwg.mxu0
  %v213 = vmul.f32 %v175, 0.2
  %v214 = vmul.f32 %v180, 0.2
  %v215 = vmul.f32 %v185, 0.2
  %v216 = vmul.f32 %v190, 0.2
  %v217 = vmul.f32 %v195, 0.2
  %v218 = vmul.f32 %v200, 0.2
  %v219 = vmul.f32 %v205, 0.2
  %v220 = vmul.f32 %v210, 0.2
  %v221 = vmax.f32 %v175, %v213
  %v222 = vmax.f32 %v180, %v214
  %v223 = vmax.f32 %v185, %v215
  %v224 = vmax.f32 %v190, %v216
  %v225 = vmax.f32 %v195, %v217
  %v226 = vmax.f32 %v200, %v218
  %v227 = vmax.f32 %v205, %v219
  %v228 = vmax.f32 %v210, %v220
  %v229 = vld [vmem:[%s3] sm:$0xff]
  %v230 = vld [vmem:[%s3 + $0x8] sm:$0xff]
  %v231 = vld [vmem:[%s3 + $0x10] sm:$0xff]
  %v232 = vld [vmem:[%s3 + $0x18] sm:$0xff]
  %v233 = vld [vmem:[%s3 + $0x20] sm:$0xff]
  %v234 = vld [vmem:[%s3 + $0x28] sm:$0xff]
  %v235 = vld [vmem:[%s3 + $0x30] sm:$0xff]
  %v236 = vld [vmem:[%s3 + $0x38] sm:$0xff]
  %v237 = vld [vmem:[%s4] sm:$0xff]
  %v238 = vld [vmem:[%s4 + $0x8] sm:$0xff]
  %v239 = vld [vmem:[%s4 + $0x10] sm:$0xff]
  %v240 = vld [vmem:[%s4 + $0x18] sm:$0xff]
  %v241 = vld [vmem:[%s4 + $0x20] sm:$0xff]
  %v242 = vld [vmem:[%s4 + $0x28] sm:$0xff]
  %v243 = vld [vmem:[%s4 + $0x30] sm:$0xff]
  %v244 = vld [vmem:[%s4 + $0x38] sm:$0xff]
  %246 = vset.pattern.permute.xlu0 0
  %247 = vperm.xlu0 %246, %v237
  %v248 = vpop.permute.xlu0 %247
  %251 = vset.pattern.permute.xlu0 0
  %252 = vperm.xlu0 %251, %v238
  %v253 = vpop.permute.xlu0 %252
  %256 = vset.pattern.permute.xlu0 0
  %257 = vperm.xlu0 %256, %v239
  %v258 = vpop.permute.xlu0 %257
  %261 = vset.pattern.permute.xlu0 0
  %262 = vperm.xlu0 %261, %v240
  %v263 = vpop.permute.xlu0 %262
  %266 = vset.pattern.permute.xlu0 0
  %267 = vperm.xlu0 %266, %v241
  %v268 = vpop.permute.xlu0 %267
  %271 = vset.pattern.permute.xlu0 0
  %272 = vperm.xlu0 %271, %v242
  %v273 = vpop.permute.xlu0 %272
  %276 = vset.pattern.permute.xlu0 0
  %277 = vperm.xlu0 %276, %v243
  %v278 = vpop.permute.xlu0 %277
  %281 = vset.pattern.permute.xlu0 0
  %282 = vperm.xlu0 %281, %v244
  %v283 = vpop.permute.xlu0 %282
  %vm285 = vcmask 523264
  %v287 = vsel %vm285, %v229, 0
  %v290 = vsel %vm285, %v230, 0
  %v293 = vsel %vm285, %v231, 0
  %v296 = vsel %vm285, %v232, 0
  %v299 = vsel %vm285, %v233, 0
  %v302 = vsel %vm285, %v234, 0
  %v305 = vsel %vm285, %v235, 0
  %v308 = vsel %vm285, %v236, 0
  %310 = vmatprep.subr.mxu0 0.0
  %311 = vmatpush1.msra.mxu0 0.0
  %312 = vmatprep.subr.mxu0 0.0
  %313 = vmatpush1.msra.mxu0 0.0
  %314 = vmatprep.subr.mxu0 0.0
  %315 = vmatpush1.msra.mxu0 0.0
  %316 = vmatprep.subr.mxu0 0.0
  %317 = vmatpush1.msra.mxu0 0.0
  %318 = vmatprep.subr.mxu0 0.0
  %319 = vmatpush1.msra.mxu0 0.0
  %320 = vmatprep.subr.mxu0 0.0
  %321 = vmatpush1.msra.mxu0 0.0
  %322 = vmatprep.subr.mxu0 0.0
  %323 = vmatpush1.msra.mxu0 0.0
  %324 = vmatprep.subr.mxu0 0.0
  %325 = vmatpush1.msra.mxu0 0.0
  %326 = vmatprep.subr.mxu0 0.0
  %327 = vmatpush1.msra.mxu0 %v228
  %328 = vmatprep.subr.mxu0 0.0
  %329 = vmatpush1.msra.mxu0 %v227
  %330 = vmatprep.subr.mxu0 0.0
  %331 = vmatpush1.msra.mxu0 %v226
  %332 = vmatprep.subr.mxu0 0.0
  %333 = vmatpush1.msra.mxu0 %v225
  %334 = vmatprep.subr.mxu0 0.0
  %335 = vmatpush1.msra.mxu0 %v224
  %336 = vmatprep.subr.mxu0 0.0
  %337 = vmatpush1.msra.mxu0 %v223
  %338 = vmatprep.subr.mxu0 0.0
  %339 = vmatpush1.msra.mxu0 %v222
  %340 = vmatprep.subr.mxu0 0.0
  %341 = vmatpush1.msra.mxu0 %v221
  %342 = vmatprep.subr.mxu0 0.0
  %343 = vmatpush2.msra.mxu0 0.0
  %344 = vmatprep.subr.mxu0 0.0
  %345 = vmatpush2.msra.mxu0 0.0
  %346 = vmatprep.subr.mxu0 0.0
  %347 = vmatpush2.msra.mxu0 0.0
  %348 = vmatprep.subr.mxu0 0.0
  %349 = vmatpush2.msra.mxu0 0.0
  %350 = vmatprep.subr.mxu0 0.0
  %351 = vmatpush2.msra.mxu0 0.0
  %352 = vmatprep.subr.mxu0 0.0
  %353 = vmatpush2.msra.mxu0 0.0
  %354 = vmatprep.subr.mxu0 0.0
  %355 = vmatpush2.msra.mxu0 0.0
  %356 = vmatprep.subr.mxu0 0.0
  %357 = vmatpush2.msra.mxu0 0.0
  %358 = vmatprep.subr.mxu0 0.0
  %359 = vmatpush2.msra.mxu0 0.0
  %360 = vmatprep.subr.mxu0 0.0
  %361 = vmatpush2.msra.mxu0 0.0
  %362 = vmatprep.subr.mxu0 0.0
  %363 = vmatpush2.msra.mxu0 0.0
  %364 = vmatprep.subr.mxu0 0.0
  %365 = vmatpush2.msra.mxu0 0.0
  %366 = vmatprep.subr.mxu0 0.0
  %367 = vmatpush2.msra.mxu0 0.0
  %368 = vmatprep.subr.mxu0 0.0
  %369 = vmatpush2.msra.mxu0 0.0
  %370 = vmatprep.subr.mxu0 0.0
  %371 = vmatpush2.msra.mxu0 0.0
  %372 = vmatprep.subr.mxu0 0.0
  %373 = vmatpush2.msra.mxu0 0.0
  %374 = vmatprep.mubr.f32.mxu0 0.0
  %375 = vmatmul.mubr.f32.gmra.mxu0 %v287
  %v376 = vpop.f32.mrf.mxu0
  %v377 = vadd.f32 %v248, %v376
  %v378 = vpop.f32.mrf.mxu0
  %379 = vmatprep.mubr.f32.mxu0 0.0
  %380 = vmatmul.mubr.f32.gmra.mxu0 %v290
  %v381 = vpop.f32.mrf.mxu0
  %v382 = vadd.f32 %v253, %v381
  %v383 = vpop.f32.mrf.mxu0
  %384 = vmatprep.mubr.f32.mxu0 0.0
  %385 = vmatmul.mubr.f32.gmra.mxu0 %v293
  %v386 = vpop.f32.mrf.mxu0
  %v387 = vadd.f32 %v258, %v386
  %v388 = vpop.f32.mrf.mxu0
  %389 = vmatprep.mubr.f32.mxu0 0.0
  %390 = vmatmul.mubr.f32.gmra.mxu0 %v296
  %v391 = vpop.f32.mrf.mxu0
  %v392 = vadd.f32 %v263, %v391
  %v393 = vpop.f32.mrf.mxu0
  %394 = vmatprep.mubr.f32.mxu0 0.0
  %395 = vmatmul.mubr.f32.gmra.mxu0 %v299
  %v396 = vpop.f32.mrf.mxu0
  %v397 = vadd.f32 %v268, %v396
  %v398 = vpop.f32.mrf.mxu0
  %399 = vmatprep.mubr.f32.mxu0 0.0
  %400 = vmatmul.mubr.f32.gmra.mxu0 %v302
  %v401 = vpop.f32.mrf.mxu0
  %v402 = vadd.f32 %v273, %v401
  %v403 = vpop.f32.mrf.mxu0
  %404 = vmatprep.mubr.f32.mxu0 0.0
  %405 = vmatmul.mubr.f32.gmra.mxu0 %v305
  %v406 = vpop.f32.mrf.mxu0
  %v407 = vadd.f32 %v278, %v406
  %v408 = vpop.f32.mrf.mxu0
  %409 = vmatprep.mubr.f32.mxu0 0.0
  %410 = vmatmul.mubr.f32.gmra.mxu0 %v308
  %v411 = vpop.f32.mrf.mxu0
  %v412 = vadd.f32 %v283, %v411
  %v413 = vpop.f32.mrf.mxu0
  %414 = vdwg.mxu0
  %v415 = vmul.f32 %v377, 0.2
  %v416 = vmul.f32 %v382, 0.2
  %v417 = vmul.f32 %v387, 0.2
  %v418 = vmul.f32 %v392, 0.2
  %v419 = vmul.f32 %v397, 0.2
  %v420 = vmul.f32 %v402, 0.2
  %v421 = vmul.f32 %v407, 0.2
  %v422 = vmul.f32 %v412, 0.2
  %v423 = vmax.f32 %v377, %v415
  %v424 = vmax.f32 %v382, %v416
  %v425 = vmax.f32 %v387, %v417
  %v426 = vmax.f32 %v392, %v418
  %v427 = vmax.f32 %v397, %v419
  %v428 = vmax.f32 %v402, %v420
  %v429 = vmax.f32 %v407, %v421
  %v430 = vmax.f32 %v412, %v422
  %s431 = scalar_lea.vmem %s3, 64
  %v432 = vld [vmem:[%s431] sm:$0xff]
  %v433 = vld [vmem:[%s431 + $0x8] sm:$0xff]
  %v434 = vld [vmem:[%s431 + $0x10] sm:$0xff]
  %v435 = vld [vmem:[%s431 + $0x18] sm:$0xff]
  %v436 = vld [vmem:[%s431 + $0x20] sm:$0xff]
  %v437 = vld [vmem:[%s431 + $0x28] sm:$0xff]
  %v438 = vld [vmem:[%s431 + $0x30] sm:$0xff]
  %v439 = vld [vmem:[%s431 + $0x38] sm:$0xff]
  %s440 = scalar_lea.vmem %s4, 64
  %v441 = vld [vmem:[%s440] sm:$0xff]
  %v442 = vld [vmem:[%s440 + $0x8] sm:$0xff]
  %v443 = vld [vmem:[%s440 + $0x10] sm:$0xff]
  %v444 = vld [vmem:[%s440 + $0x18] sm:$0xff]
  %v445 = vld [vmem:[%s440 + $0x20] sm:$0xff]
  %v446 = vld [vmem:[%s440 + $0x28] sm:$0xff]
  %v447 = vld [vmem:[%s440 + $0x30] sm:$0xff]
  %v448 = vld [vmem:[%s440 + $0x38] sm:$0xff]
  %450 = vset.pattern.permute.xlu0 0
  %451 = vperm.xlu0 %450, %v441
  %v452 = vpop.permute.xlu0 %451
  %455 = vset.pattern.permute.xlu0 0
  %456 = vperm.xlu0 %455, %v442
  %v457 = vpop.permute.xlu0 %456
  %460 = vset.pattern.permute.xlu0 0
  %461 = vperm.xlu0 %460, %v443
  %v462 = vpop.permute.xlu0 %461
  %465 = vset.pattern.permute.xlu0 0
  %466 = vperm.xlu0 %465, %v444
  %v467 = vpop.permute.xlu0 %466
  %470 = vset.pattern.permute.xlu0 0
  %471 = vperm.xlu0 %470, %v445
  %v472 = vpop.permute.xlu0 %471
  %475 = vset.pattern.permute.xlu0 0
  %476 = vperm.xlu0 %475, %v446
  %v477 = vpop.permute.xlu0 %476
  %480 = vset.pattern.permute.xlu0 0
  %481 = vperm.xlu0 %480, %v447
  %v482 = vpop.permute.xlu0 %481
  %485 = vset.pattern.permute.xlu0 0
  %486 = vperm.xlu0 %485, %v448
  %v487 = vpop.permute.xlu0 %486
  %v490 = vsel %vm285, %v432, 0
  %v493 = vsel %vm285, %v433, 0
  %v496 = vsel %vm285, %v434, 0
  %v499 = vsel %vm285, %v435, 0
  %v502 = vsel %vm285, %v436, 0
  %v505 = vsel %vm285, %v437, 0
  %v508 = vsel %vm285, %v438, 0
  %v511 = vsel %vm285, %v439, 0
  %513 = vmatprep.subr.mxu0 0.0
  %514 = vmatpush1.msra.mxu0 0.0
  %515 = vmatprep.subr.mxu0 0.0
  %516 = vmatpush1.msra.mxu0 0.0
  %517 = vmatprep.subr.mxu0 0.0
  %518 = vmatpush1.msra.mxu0 0.0
  %519 = vmatprep.subr.mxu0 0.0
  %520 = vmatpush1.msra.mxu0 0.0
  %521 = vmatprep.subr.mxu0 0.0
  %522 = vmatpush1.msra.mxu0 0.0
  %523 = vmatprep.subr.mxu0 0.0
  %524 = vmatpush1.msra.mxu0 0.0
  %525 = vmatprep.subr.mxu0 0.0
  %526 = vmatpush1.msra.mxu0 0.0
  %527 = vmatprep.subr.mxu0 0.0
  %528 = vmatpush1.msra.mxu0 0.0
  %529 = vmatprep.subr.mxu0 0.0
  %530 = vmatpush1.msra.mxu0 %v430
  %531 = vmatprep.subr.mxu0 0.0
  %532 = vmatpush1.msra.mxu0 %v429
  %533 = vmatprep.subr.mxu0 0.0
  %534 = vmatpush1.msra.mxu0 %v428
  %535 = vmatprep.subr.mxu0 0.0
  %536 = vmatpush1.msra.mxu0 %v427
  %537 = vmatprep.subr.mxu0 0.0
  %538 = vmatpush1.msra.mxu0 %v426
  %539 = vmatprep.subr.mxu0 0.0
  %540 = vmatpush1.msra.mxu0 %v425
  %541 = vmatprep.subr.mxu0 0.0
  %542 = vmatpush1.msra.mxu0 %v424
  %543 = vmatprep.subr.mxu0 0.0
  %544 = vmatpush1.msra.mxu0 %v423
  %545 = vmatprep.subr.mxu0 0.0
  %546 = vmatpush2.msra.mxu0 0.0
  %547 = vmatprep.subr.mxu0 0.0
  %548 = vmatpush2.msra.mxu0 0.0
  %549 = vmatprep.subr.mxu0 0.0
  %550 = vmatpush2.msra.mxu0 0.0
  %551 = vmatprep.subr.mxu0 0.0
  %552 = vmatpush2.msra.mxu0 0.0
  %553 = vmatprep.subr.mxu0 0.0
  %554 = vmatpush2.msra.mxu0 0.0
  %555 = vmatprep.subr.mxu0 0.0
  %556 = vmatpush2.msra.mxu0 0.0
  %557 = vmatprep.subr.mxu0 0.0
  %558 = vmatpush2.msra.mxu0 0.0
  %559 = vmatprep.subr.mxu0 0.0
  %560 = vmatpush2.msra.mxu0 0.0
  %561 = vmatprep.subr.mxu0 0.0
  %562 = vmatpush2.msra.mxu0 0.0
  %563 = vmatprep.subr.mxu0 0.0
  %564 = vmatpush2.msra.mxu0 0.0
  %565 = vmatprep.subr.mxu0 0.0
  %566 = vmatpush2.msra.mxu0 0.0
  %567 = vmatprep.subr.mxu0 0.0
  %568 = vmatpush2.msra.mxu0 0.0
  %569 = vmatprep.subr.mxu0 0.0
  %570 = vmatpush2.msra.mxu0 0.0
  %571 = vmatprep.subr.mxu0 0.0
  %572 = vmatpush2.msra.mxu0 0.0
  %573 = vmatprep.subr.mxu0 0.0
  %574 = vmatpush2.msra.mxu0 0.0
  %575 = vmatprep.subr.mxu0 0.0
  %576 = vmatpush2.msra.mxu0 0.0
  %577 = vmatprep.mubr.f32.mxu0 0.0
  %578 = vmatmul.mubr.f32.gmra.mxu0 %v490
  %v579 = vpop.f32.mrf.mxu0
  %v580 = vadd.f32 %v452, %v579
  %v581 = vpop.f32.mrf.mxu0
  %582 = vmatprep.mubr.f32.mxu0 0.0
  %583 = vmatmul.mubr.f32.gmra.mxu0 %v493
  %v584 = vpop.f32.mrf.mxu0
  %v585 = vadd.f32 %v457, %v584
  %v586 = vpop.f32.mrf.mxu0
  %587 = vmatprep.mubr.f32.mxu0 0.0
  %588 = vmatmul.mubr.f32.gmra.mxu0 %v496
  %v589 = vpop.f32.mrf.mxu0
  %v590 = vadd.f32 %v462, %v589
  %v591 = vpop.f32.mrf.mxu0
  %592 = vmatprep.mubr.f32.mxu0 0.0
  %593 = vmatmul.mubr.f32.gmra.mxu0 %v499
  %v594 = vpop.f32.mrf.mxu0
  %v595 = vadd.f32 %v467, %v594
  %v596 = vpop.f32.mrf.mxu0
  %597 = vmatprep.mubr.f32.mxu0 0.0
  %598 = vmatmul.mubr.f32.gmra.mxu0 %v502
  %v599 = vpop.f32.mrf.mxu0
  %v600 = vadd.f32 %v472, %v599
  %v601 = vpop.f32.mrf.mxu0
  %602 = vmatprep.mubr.f32.mxu0 0.0
  %603 = vmatmul.mubr.f32.gmra.mxu0 %v505
  %v604 = vpop.f32.mrf.mxu0
  %v605 = vadd.f32 %v477, %v604
  %v606 = vpop.f32.mrf.mxu0
  %607 = vmatprep.mubr.f32.mxu0 0.0
  %608 = vmatmul.mubr.f32.gmra.mxu0 %v508
  %v609 = vpop.f32.mrf.mxu0
  %v610 = vadd.f32 %v482, %v609
  %v611 = vpop.f32.mrf.mxu0
  %612 = vmatprep.mubr.f32.mxu0 0.0
  %613 = vmatmul.mubr.f32.gmra.mxu0 %v511
  %v614 = vpop.f32.mrf.mxu0
  %v615 = vadd.f32 %v487, %v614
  %v616 = vpop.f32.mrf.mxu0
  %617 = vdwg.mxu0
  %v618 = vmul.f32 %v580, 0.2
  %v619 = vmul.f32 %v585, 0.2
  %v620 = vmul.f32 %v590, 0.2
  %v621 = vmul.f32 %v595, 0.2
  %v622 = vmul.f32 %v600, 0.2
  %v623 = vmul.f32 %v605, 0.2
  %v624 = vmul.f32 %v610, 0.2
  %v625 = vmul.f32 %v615, 0.2
  %v626 = vmax.f32 %v580, %v618
  %v627 = vmax.f32 %v585, %v619
  %v628 = vmax.f32 %v590, %v620
  %v629 = vmax.f32 %v595, %v621
  %v630 = vmax.f32 %v600, %v622
  %v631 = vmax.f32 %v605, %v623
  %v632 = vmax.f32 %v610, %v624
  %v633 = vmax.f32 %v615, %v625
  %s634 = scalar_lea.vmem %s3, 128
  %v635 = vld [vmem:[%s634] sm:$0xff]
  %v636 = vld [vmem:[%s634 + $0x8] sm:$0xff]
  %v637 = vld [vmem:[%s634 + $0x10] sm:$0xff]
  %v638 = vld [vmem:[%s634 + $0x18] sm:$0xff]
  %v639 = vld [vmem:[%s634 + $0x20] sm:$0xff]
  %v640 = vld [vmem:[%s634 + $0x28] sm:$0xff]
  %v641 = vld [vmem:[%s634 + $0x30] sm:$0xff]
  %v642 = vld [vmem:[%s634 + $0x38] sm:$0xff]
  %s643 = scalar_lea.vmem %s4, 128
  %v644 = vld [vmem:[%s643] sm:$0xff]
  %v645 = vld [vmem:[%s643 + $0x8] sm:$0xff]
  %v646 = vld [vmem:[%s643 + $0x10] sm:$0xff]
  %v647 = vld [vmem:[%s643 + $0x18] sm:$0xff]
  %v648 = vld [vmem:[%s643 + $0x20] sm:$0xff]
  %v649 = vld [vmem:[%s643 + $0x28] sm:$0xff]
  %v650 = vld [vmem:[%s643 + $0x30] sm:$0xff]
  %v651 = vld [vmem:[%s643 + $0x38] sm:$0xff]
  %653 = vset.pattern.permute.xlu0 0
  %654 = vperm.xlu0 %653, %v644
  %v655 = vpop.permute.xlu0 %654
  %658 = vset.pattern.permute.xlu0 0
  %659 = vperm.xlu0 %658, %v645
  %v660 = vpop.permute.xlu0 %659
  %663 = vset.pattern.permute.xlu0 0
  %664 = vperm.xlu0 %663, %v646
  %v665 = vpop.permute.xlu0 %664
  %668 = vset.pattern.permute.xlu0 0
  %669 = vperm.xlu0 %668, %v647
  %v670 = vpop.permute.xlu0 %669
  %673 = vset.pattern.permute.xlu0 0
  %674 = vperm.xlu0 %673, %v648
  %v675 = vpop.permute.xlu0 %674
  %678 = vset.pattern.permute.xlu0 0
  %679 = vperm.xlu0 %678, %v649
  %v680 = vpop.permute.xlu0 %679
  %683 = vset.pattern.permute.xlu0 0
  %684 = vperm.xlu0 %683, %v650
  %v685 = vpop.permute.xlu0 %684
  %688 = vset.pattern.permute.xlu0 0
  %689 = vperm.xlu0 %688, %v651
  %v690 = vpop.permute.xlu0 %689
  %v693 = vsel %vm285, %v635, 0
  %v696 = vsel %vm285, %v636, 0
  %v699 = vsel %vm285, %v637, 0
  %v702 = vsel %vm285, %v638, 0
  %v705 = vsel %vm285, %v639, 0
  %v708 = vsel %vm285, %v640, 0
  %v711 = vsel %vm285, %v641, 0
  %v714 = vsel %vm285, %v642, 0
  %716 = vmatprep.subr.mxu0 0.0
  %717 = vmatpush1.msra.mxu0 0.0
  %718 = vmatprep.subr.mxu0 0.0
  %719 = vmatpush1.msra.mxu0 0.0
  %720 = vmatprep.subr.mxu0 0.0
  %721 = vmatpush1.msra.mxu0 0.0
  %722 = vmatprep.subr.mxu0 0.0
  %723 = vmatpush1.msra.mxu0 0.0
  %724 = vmatprep.subr.mxu0 0.0
  %725 = vmatpush1.msra.mxu0 0.0
  %726 = vmatprep.subr.mxu0 0.0
  %727 = vmatpush1.msra.mxu0 0.0
  %728 = vmatprep.subr.mxu0 0.0
  %729 = vmatpush1.msra.mxu0 0.0
  %730 = vmatprep.subr.mxu0 0.0
  %731 = vmatpush1.msra.mxu0 0.0
  %732 = vmatprep.subr.mxu0 0.0
  %733 = vmatpush1.msra.mxu0 %v633
  %734 = vmatprep.subr.mxu0 0.0
  %735 = vmatpush1.msra.mxu0 %v632
  %736 = vmatprep.subr.mxu0 0.0
  %737 = vmatpush1.msra.mxu0 %v631
  %738 = vmatprep.subr.mxu0 0.0
  %739 = vmatpush1.msra.mxu0 %v630
  %740 = vmatprep.subr.mxu0 0.0
  %741 = vmatpush1.msra.mxu0 %v629
  %742 = vmatprep.subr.mxu0 0.0
  %743 = vmatpush1.msra.mxu0 %v628
  %744 = vmatprep.subr.mxu0 0.0
  %745 = vmatpush1.msra.mxu0 %v627
  %746 = vmatprep.subr.mxu0 0.0
  %747 = vmatpush1.msra.mxu0 %v626
  %748 = vmatprep.subr.mxu0 0.0
  %749 = vmatpush2.msra.mxu0 0.0
  %750 = vmatprep.subr.mxu0 0.0
  %751 = vmatpush2.msra.mxu0 0.0
  %752 = vmatprep.subr.mxu0 0.0
  %753 = vmatpush2.msra.mxu0 0.0
  %754 = vmatprep.subr.mxu0 0.0
  %755 = vmatpush2.msra.mxu0 0.0
  %756 = vmatprep.subr.mxu0 0.0
  %757 = vmatpush2.msra.mxu0 0.0
  %758 = vmatprep.subr.mxu0 0.0
  %759 = vmatpush2.msra.mxu0 0.0
  %760 = vmatprep.subr.mxu0 0.0
  %761 = vmatpush2.msra.mxu0 0.0
  %762 = vmatprep.subr.mxu0 0.0
  %763 = vmatpush2.msra.mxu0 0.0
  %764 = vmatprep.subr.mxu0 0.0
  %765 = vmatpush2.msra.mxu0 0.0
  %766 = vmatprep.subr.mxu0 0.0
  %767 = vmatpush2.msra.mxu0 0.0
  %768 = vmatprep.subr.mxu0 0.0
  %769 = vmatpush2.msra.mxu0 0.0
  %770 = vmatprep.subr.mxu0 0.0
  %771 = vmatpush2.msra.mxu0 0.0
  %772 = vmatprep.subr.mxu0 0.0
  %773 = vmatpush2.msra.mxu0 0.0
  %774 = vmatprep.subr.mxu0 0.0
  %775 = vmatpush2.msra.mxu0 0.0
  %776 = vmatprep.subr.mxu0 0.0
  %777 = vmatpush2.msra.mxu0 0.0
  %778 = vmatprep.subr.mxu0 0.0
  %779 = vmatpush2.msra.mxu0 0.0
  %780 = vmatprep.mubr.f32.mxu0 0.0
  %781 = vmatmul.mubr.f32.gmra.mxu0 %v693
  %v782 = vpop.f32.mrf.mxu0
  %v783 = vadd.f32 %v655, %v782
  %v784 = vpop.f32.mrf.mxu0
  %785 = vmatprep.mubr.f32.mxu0 0.0
  %786 = vmatmul.mubr.f32.gmra.mxu0 %v696
  %v787 = vpop.f32.mrf.mxu0
  %v788 = vadd.f32 %v660, %v787
  %v789 = vpop.f32.mrf.mxu0
  %790 = vmatprep.mubr.f32.mxu0 0.0
  %791 = vmatmul.mubr.f32.gmra.mxu0 %v699
  %v792 = vpop.f32.mrf.mxu0
  %v793 = vadd.f32 %v665, %v792
  %v794 = vpop.f32.mrf.mxu0
  %795 = vmatprep.mubr.f32.mxu0 0.0
  %796 = vmatmul.mubr.f32.gmra.mxu0 %v702
  %v797 = vpop.f32.mrf.mxu0
  %v798 = vadd.f32 %v670, %v797
  %v799 = vpop.f32.mrf.mxu0
  %800 = vmatprep.mubr.f32.mxu0 0.0
  %801 = vmatmul.mubr.f32.gmra.mxu0 %v705
  %v802 = vpop.f32.mrf.mxu0
  %v803 = vadd.f32 %v675, %v802
  %v804 = vpop.f32.mrf.mxu0
  %805 = vmatprep.mubr.f32.mxu0 0.0
  %806 = vmatmul.mubr.f32.gmra.mxu0 %v708
  %v807 = vpop.f32.mrf.mxu0
  %v808 = vadd.f32 %v680, %v807
  %v809 = vpop.f32.mrf.mxu0
  %810 = vmatprep.mubr.f32.mxu0 0.0
  %811 = vmatmul.mubr.f32.gmra.mxu0 %v711
  %v812 = vpop.f32.mrf.mxu0
  %v813 = vadd.f32 %v685, %v812
  %v814 = vpop.f32.mrf.mxu0
  %815 = vmatprep.mubr.f32.mxu0 0.0
  %816 = vmatmul.mubr.f32.gmra.mxu0 %v714
  %v817 = vpop.f32.mrf.mxu0
  %v818 = vadd.f32 %v690, %v817
  %v819 = vpop.f32.mrf.mxu0
  %820 = vdwg.mxu0
  %v821 = vmul.f32 %v783, 0.2
  %v822 = vmul.f32 %v788, 0.2
  %v823 = vmul.f32 %v793, 0.2
  %v824 = vmul.f32 %v798, 0.2
  %v825 = vmul.f32 %v803, 0.2
  %v826 = vmul.f32 %v808, 0.2
  %v827 = vmul.f32 %v813, 0.2
  %v828 = vmul.f32 %v818, 0.2
  %v829 = vmax.f32 %v783, %v821
  %v830 = vmax.f32 %v788, %v822
  %v831 = vmax.f32 %v793, %v823
  %v832 = vmax.f32 %v798, %v824
  %v833 = vmax.f32 %v803, %v825
  %v834 = vmax.f32 %v808, %v826
  %v835 = vmax.f32 %v813, %v827
  %v836 = vmax.f32 %v818, %v828
  %v837 = vld [vmem:[%s5] sm:$0xff]
  %v838 = vld [vmem:[%s6] sm:$0xff]
  %840 = vset.pattern.permute.xlu0 0
  %841 = vperm.xlu0 %840, %v838
  %v842 = vpop.permute.xlu0 %841
  %v845 = vsel %vm285, %v837, 0
  %847 = vmatprep.subr.mxu0 0.0
  %848 = vmatpush1.msra.mxu0 0.0
  %849 = vmatprep.subr.mxu0 0.0
  %850 = vmatpush1.msra.mxu0 0.0
  %851 = vmatprep.subr.mxu0 0.0
  %852 = vmatpush1.msra.mxu0 0.0
  %853 = vmatprep.subr.mxu0 0.0
  %854 = vmatpush1.msra.mxu0 0.0
  %855 = vmatprep.subr.mxu0 0.0
  %856 = vmatpush1.msra.mxu0 0.0
  %857 = vmatprep.subr.mxu0 0.0
  %858 = vmatpush1.msra.mxu0 0.0
  %859 = vmatprep.subr.mxu0 0.0
  %860 = vmatpush1.msra.mxu0 0.0
  %861 = vmatprep.subr.mxu0 0.0
  %862 = vmatpush1.msra.mxu0 0.0
  %863 = vmatprep.subr.mxu0 0.0
  %864 = vmatpush1.msra.mxu0 %v836
  %865 = vmatprep.subr.mxu0 0.0
  %866 = vmatpush1.msra.mxu0 %v835
  %867 = vmatprep.subr.mxu0 0.0
  %868 = vmatpush1.msra.mxu0 %v834
  %869 = vmatprep.subr.mxu0 0.0
  %870 = vmatpush1.msra.mxu0 %v833
  %871 = vmatprep.subr.mxu0 0.0
  %872 = vmatpush1.msra.mxu0 %v832
  %873 = vmatprep.subr.mxu0 0.0
  %874 = vmatpush1.msra.mxu0 %v831
  %875 = vmatprep.subr.mxu0 0.0
  %876 = vmatpush1.msra.mxu0 %v830
  %877 = vmatprep.subr.mxu0 0.0
  %878 = vmatpush1.msra.mxu0 %v829
  %879 = vmatprep.subr.mxu0 0.0
  %880 = vmatpush2.msra.mxu0 0.0
  %881 = vmatprep.subr.mxu0 0.0
  %882 = vmatpush2.msra.mxu0 0.0
  %883 = vmatprep.subr.mxu0 0.0
  %884 = vmatpush2.msra.mxu0 0.0
  %885 = vmatprep.subr.mxu0 0.0
  %886 = vmatpush2.msra.mxu0 0.0
  %887 = vmatprep.subr.mxu0 0.0
  %888 = vmatpush2.msra.mxu0 0.0
  %889 = vmatprep.subr.mxu0 0.0
  %890 = vmatpush2.msra.mxu0 0.0
  %891 = vmatprep.subr.mxu0 0.0
  %892 = vmatpush2.msra.mxu0 0.0
  %893 = vmatprep.subr.mxu0 0.0
  %894 = vmatpush2.msra.mxu0 0.0
  %895 = vmatprep.subr.mxu0 0.0
  %896 = vmatpush2.msra.mxu0 0.0
  %897 = vmatprep.subr.mxu0 0.0
  %898 = vmatpush2.msra.mxu0 0.0
  %899 = vmatprep.subr.mxu0 0.0
  %900 = vmatpush2.msra.mxu0 0.0
  %901 = vmatprep.subr.mxu0 0.0
  %902 = vmatpush2.msra.mxu0 0.0
  %903 = vmatprep.subr.mxu0 0.0
  %904 = vmatpush2.msra.mxu0 0.0
  %905 = vmatprep.subr.mxu0 0.0
  %906 = vmatpush2.msra.mxu0 0.0
  %907 = vmatprep.subr.mxu0 0.0
  %908 = vmatpush2.msra.mxu0 0.0
  %909 = vmatprep.subr.mxu0 0.0
  %910 = vmatpush2.msra.mxu0 0.0
  %911 = vmatprep.mubr.f32.mxu0 0.0
  %912 = vmatmul.mubr.f32.gmra.mxu0 %v845
  %v913 = vpop.f32.mrf.mxu0
  %v914 = vadd.f32 %v842, %v913
  %v915 = vpop.f32.mrf.mxu0
  %916 = vdwg.mxu0
  %917 = vst [vmem:[%s7] sm:$0xff] %v914
  // Predicated region
  $region30: #{mlp_decoder_forward.1} parent=0 // pred_check
    _
  $region31: #{mlp_decoder_forward.1} parent=0 // pred_check_branch
    %919 = sbr.rel (0) target = $region33
  $region32: #{mlp_decoder_forward.1} parent=0 // pred_region
    _
  $region33: #{mlp_decoder_forward.1} parent=0 // pred_fallthru
    _
  // Predicated region
  $region34: #{mlp_decoder_forward.1} parent=0 // pred_check
    _
  $region35: #{mlp_decoder_forward.1} parent=0 // pred_check_branch
    %921 = sbr.rel (0) target = $region37
  $region36: #{mlp_decoder_forward.1} parent=0 // pred_region
    _
  $region37: #{mlp_decoder_forward.1} parent=0 // pred_fallthru
    _

</llo_original>
